<compile_context>
chip_gen: v7x
topology: tpu7x:2x2x1
jax: 0.10.0
libtpu: 0.0.40
codegen_flags: <defaults>
</compile_context>

<pallas_src>
import functools

import jax
import jax.numpy as jnp
from jax.experimental import pallas as pl
from jax.experimental.pallas import tpu as pltpu


_LANE = 128
_SUBLANE = 8
_TM = 256            # row/col tile for the large-M fallback path
_MAX_TK = 8192       # cap on the contraction tile (diminishing returns beyond)


# ----------------------------- sizing helpers --------------------------------


def _round_up(x, q):
    return ((x + q - 1) // q) * q


def _vmem_capacity_bytes():
    """Physical VMEM per core; conservative (v7x) default if the query fails."""
    try:
        info = pltpu.get_tpu_info()
        cap = getattr(info, "vmem_capacity_bytes", None)
        if cap:
            return int(cap)
    except Exception:
        pass
    return 64 * 1024 * 1024


def _budgets():
    cap = _vmem_capacity_bytes()
    tile_budget = int(cap * 0.55)           # working set (double-buffered tiles + acc)
    vmem_limit = int(cap * 0.85)            # scoped-VMEM limit handed to Mosaic
    return tile_budget, vmem_limit


def _k_tiling(K, f_budget_bytes, m_rows, itemsize):
    """Pick (tk, nk, K_pad): tk multiple of 128, K_pad = nk * tk >= K.

    tk is sized so the double-buffered (m_rows, tk) F tile fits `f_budget_bytes`.
    Padding K (instead of falling back to tk == K) keeps tiles sane for
    arbitrary spatial dims; zero columns contribute nothing to F @ F.T."""
    max_tk = f_budget_bytes // max(1, 2 * m_rows * itemsize)
    max_tk = max(_LANE, min(_MAX_TK, (max_tk // _LANE) * _LANE))
    nk = max(1, -(-K // max_tk))
    tk = _round_up(-(-K // nk), _LANE)
    return tk, nk, nk * tk


def _small_path_ok(M, tile_budget):
    # resident (M, M) f32 accumulator + resident (M, M) f32 block (target or
    # output, counted double-buffered) + a minimal double-buffered bf16 F tile.
    resident = 3 * M * M * 4
    min_f = 2 * M * _LANE * 2
    return resident + min_f <= tile_budget


def _prep_f(feature, f_budget_bytes):
    """Flatten to (M, K), cast to bf16 (f32 accumulation in-kernel), pad K."""
    a, b, c, d = feature.shape
    M, K = a * b, c * d
    f = feature.reshape(M, K)
    if f.dtype != jnp.bfloat16:
        f = f.astype(jnp.bfloat16)
    tk, nk, K_pad = _k_tiling(K, f_budget_bytes, M, 2)
    if K_pad != K:
        f = jnp.pad(f, ((0, 0), (0, K_pad - K)))
    return f, tk, nk


# -------------------- kernels: single-row-block (dedup) path -----------------


def _gram_rowblock_kernel(f_ref, o_ref, acc_ref, *, scale):
    """Grid (nk,). One (M, tk) bf16 F tile per step, contracted with itself."""
    k = pl.program_id(0)

    @pl.when(k == 0)
    def _():
        acc_ref[...] = jnp.zeros_like(acc_ref)

    f = f_ref[...]                               # single load, used for both operands
    acc_ref[...] += jax.lax.dot_general(
        f, f,
        dimension_numbers=(((1,), (1,)), ((), ())),
        preferred_element_type=jnp.float32,
    )

    @pl.when(k == pl.num_programs(0) - 1)
    def _():
        o_ref[...] = (acc_ref[...] * scale).astype(o_ref.dtype)


def _style_loss_rowblock_kernel(f_ref, t_ref, loss_ref, acc_ref, *, scale, inv_count):
    """Gram + fused MSE against the resident target gram; scalar loss to SMEM."""
    k = pl.program_id(0)

    @pl.when(k == 0)
    def _():
        acc_ref[...] = jnp.zeros_like(acc_ref)

    f = f_ref[...]
    acc_ref[...] += jax.lax.dot_general(
        f, f,
        dimension_numbers=(((1,), (1,)), ((), ())),
        preferred_element_type=jnp.float32,
    )

    @pl.when(k == pl.num_programs(0) - 1)
    def _():
        diff = acc_ref[...] * scale - t_ref[...]
        loss_ref[0, 0] = jnp.sum(diff * diff) * inv_count


# -------------------- kernels: large-M fallback path --------------------------


def _gram_tiled_kernel(fa_ref, fb_ref, o_ref, acc_ref, *, scale):
    k = pl.program_id(2)

    @pl.when(k == 0)
    def _():
        acc_ref[...] = jnp.zeros_like(acc_ref)

    acc_ref[...] += jax.lax.dot_general(
        fa_ref[...], fb_ref[...],
        dimension_numbers=(((1,), (1,)), ((), ())),
        preferred_element_type=jnp.float32,
    )

    @pl.when(k == pl.num_programs(2) - 1)
    def _():
        o_ref[...] = (acc_ref[...] * scale).astype(o_ref.dtype)


def _mse_tiled_kernel(g_ref, t_ref, o_ref, acc_ref, *, inv_count):
    i, j = pl.program_id(0), pl.program_id(1)

    @pl.when((i == 0) & (j == 0))
    def _():
        acc_ref[0] = 0.0

    d = g_ref[...] - t_ref[...]
    acc_ref[0] += jnp.sum(d * d)

    @pl.when((i == pl.num_programs(0) - 1) & (j == pl.num_programs(1) - 1))
    def _():
        o_ref[0, 0] = acc_ref[0] * inv_count


# ------------------------------- wrappers -------------------------------------


def _gram_padded(feature, scale, tile_budget, vmem_limit):
    """General tiled gram for large M: returns padded (M_pad, M_pad) f32 G."""
    a, b, c, d = feature.shape
    M, K = a * b, c * d
    M_pad = _round_up(M, _TM)
    f = feature.reshape(M, K)
    if f.dtype != jnp.bfloat16:
        f = f.astype(jnp.bfloat16)
    resident = 3 * _TM * _TM * 4
    tk, nk, K_pad = _k_tiling(K, (tile_budget - resident) // 2, _TM, 2)
    f = jnp.pad(f, ((0, M_pad - M), (0, K_pad - K)))
    grid = (M_pad // _TM, M_pad // _TM, nk)
    G = pl.pallas_call(
        functools.partial(_gram_tiled_kernel, scale=scale),
        out_shape=jax.ShapeDtypeStruct((M_pad, M_pad), jnp.float32),
        grid_spec=pltpu.PrefetchScalarGridSpec(
            num_scalar_prefetch=0,
            grid=grid,
            in_specs=[
                pl.BlockSpec((_TM, tk), lambda i, j, k: (i, k)),
                pl.BlockSpec((_TM, tk), lambda i, j, k: (j, k)),
            ],
            out_specs=pl.BlockSpec((_TM, _TM), lambda i, j, k: (i, j)),
            scratch_shapes=[pltpu.VMEM((_TM, _TM), jnp.float32)],
        ),
        compiler_params=pltpu.CompilerParams(
            dimension_semantics=("parallel", "parallel", "arbitrary"),
            vmem_limit_bytes=vmem_limit,
        ),
        cost_estimate=pl.CostEstimate(
            flops=2 * M_pad * M_pad * K_pad,
            transcendentals=0,
            bytes_accessed=2 * M_pad * K_pad * 2 + M_pad * M_pad * 4,
        ),
    )(f, f)
    return G, M_pad


def _mse_tiled(G_pad, T_pad, inv_count, vmem_limit):
    M_pad = G_pad.shape[0]
    grid = (M_pad // _TM, M_pad // _TM)
    out = pl.pallas_call(
        functools.partial(_mse_tiled_kernel, inv_count=inv_count),
        out_shape=jax.ShapeDtypeStruct((1, 1), jnp.float32),
        grid_spec=pltpu.PrefetchScalarGridSpec(
            num_scalar_prefetch=0,
            grid=grid,
            in_specs=[
                pl.BlockSpec((_TM, _TM), lambda i, j: (i, j)),
                pl.BlockSpec((_TM, _TM), lambda i, j: (i, j)),
            ],
            out_specs=pl.BlockSpec(memory_space=pltpu.MemorySpace.SMEM),
            scratch_shapes=[pltpu.SMEM((1,), jnp.float32)],
        ),
        compiler_params=pltpu.CompilerParams(
            dimension_semantics=("arbitrary", "arbitrary"),
            vmem_limit_bytes=vmem_limit,
        ),
    )(G_pad, T_pad)
    return out[0, 0]


def gram_matrix(feature):
    """G = (F @ F.T) / (a*b*c*d), F = feature.reshape(a*b, c*d). Returns f32 (M, M)."""
    a, b, c, d = feature.shape
    M, K = a * b, c * d
    scale = 1.0 / float(a * b * c * d)
    tile_budget, vmem_limit = _budgets()

    if _small_path_ok(M, tile_budget):
        f, tk, nk = _prep_f(feature, tile_budget - 3 * M * M * 4)
        return pl.pallas_call(
            functools.partial(_gram_rowblock_kernel, scale=scale),
            out_shape=jax.ShapeDtypeStruct((M, M), jnp.float32),
            grid_spec=pltpu.PrefetchScalarGridSpec(
                num_scalar_prefetch=0,
                grid=(nk,),
                in_specs=[pl.BlockSpec((M, tk), lambda k: (0, k))],
                out_specs=pl.BlockSpec((M, M), lambda k: (0, 0)),
                scratch_shapes=[pltpu.VMEM((M, M), jnp.float32)],
            ),
            compiler_params=pltpu.CompilerParams(
                dimension_semantics=("arbitrary",),
                vmem_limit_bytes=vmem_limit,
            ),
            cost_estimate=pl.CostEstimate(
                flops=2 * M * M * f.shape[1],
                transcendentals=0,
                bytes_accessed=f.size * 2 + M * M * 4,
            ),
        )(f)

    G_pad, _ = _gram_padded(feature, scale, tile_budget, vmem_limit)
    return G_pad[:M, :M]


def style_loss_value(feature, target_gram):
    """mse_loss(gram_matrix(feature), target_gram), fused when M fits one tile."""
    a, b, c, d = feature.shape
    M, K = a * b, c * d
    scale = 1.0 / float(a * b * c * d)
    inv_count = 1.0 / float(M * M)
    tile_budget, vmem_limit = _budgets()

    if _small_path_ok(M, tile_budget):
        f, tk, nk = _prep_f(feature, tile_budget - 3 * M * M * 4)
        out = pl.pallas_call(
            functools.partial(
                _style_loss_rowblock_kernel, scale=scale, inv_count=inv_count),
            out_shape=jax.ShapeDtypeStruct((1, 1), jnp.float32),
            grid_spec=pltpu.PrefetchScalarGridSpec(
                num_scalar_prefetch=0,
                grid=(nk,),
                in_specs=[
                    pl.BlockSpec((M, tk), lambda k: (0, k)),     # F (dedup'd, bf16)
                    pl.BlockSpec((M, M), lambda k: (0, 0)),      # resident target gram
                ],
                out_specs=pl.BlockSpec(memory_space=pltpu.MemorySpace.SMEM),
                scratch_shapes=[pltpu.VMEM((M, M), jnp.float32)],
            ),
            compiler_params=pltpu.CompilerParams(
                dimension_semantics=("arbitrary",),
                vmem_limit_bytes=vmem_limit,
            ),
            cost_estimate=pl.CostEstimate(
                flops=2 * M * M * f.shape[1],
                transcendentals=0,
                bytes_accessed=f.size * 2 + M * M * 4 + 4,
            ),
        )(f, target_gram.astype(jnp.float32))
        return out[0, 0]

    # Large-M fallback: padded tiled gram + tiled MSE (padded regions are zero
    # in both G and T, so they contribute nothing; inv_count uses the true M).
    G_pad, M_pad = _gram_padded(feature, scale, tile_budget, vmem_limit)
    T_pad = jnp.pad(target_gram.astype(jnp.float32),
                    ((0, M_pad - M), (0, M_pad - M)))
    return _mse_tiled(G_pad, T_pad, inv_count, vmem_limit)


# ------------------------------- StyleLoss ------------------------------------


class StyleLoss:
    """Functional mirror of the PyTorch module: stores the target gram at
    construction, computes self.loss on call, returns the input unchanged."""

    def __init__(self, target_feature):
        # TODO(synk): .detach() has no needed equivalent here (no implicit
        # autograd graph); the target gram is simply a stored array.
        self.target = gram_matrix(target_feature)
        self.loss = None

    def __call__(self, x):
        self.loss = style_loss_value(x, self.target)
        return x


# --------------------------------- main ---------------------------------------


if __name__ == "__main__":
    key = jax.random.PRNGKey(0)
    k1, k2 = jax.random.split(key)

    # NCHW feature maps: a=2, b=4, c=16, d=16 -> F is (8, 256), G is (8, 8).
    target_feature = jax.random.uniform(k1, (2, 4, 16, 16), dtype=jnp.float32)
    input_feature = jax.random.uniform(k2, (2, 4, 16, 16), dtype=jnp.float32)

    sl = StyleLoss(target_feature)
    out = sl(input_feature)
    out = jax.block_until_ready(out)
    loss = jax.block_until_ready(sl.loss)

    # ---- reference check (plain JAX f32, mirrors the PyTorch math) ----
    def gram_ref(x):
        a, b, c, d = x.shape
        f = x.reshape(a * b, c * d)
        g = jnp.dot(f, f.T, precision=jax.lax.Precision.HIGHEST)
        return g / (a * b * c * d)

    G_k = gram_matrix(input_feature)
    T_k = sl.target
    G_ref = gram_ref(input_feature)
    T_ref = gram_ref(target_feature)
    loss_ref = jnp.mean((G_ref - T_ref) ** 2)

    assert out.shape == input_feature.shape and out.dtype == input_feature.dtype
    assert jnp.allclose(out, input_feature)                    # identity pass-through
    # Gram kernels vs f32 reference (bf16 MXU feed -> slightly looser tolerance).
    assert jnp.allclose(G_k, G_ref, rtol=2e-2, atol=1e-3)
    assert jnp.allclose(T_k, T_ref, rtol=2e-2, atol=1e-3)
    # Fused loss vs a recompute on the kernel's own gram matrices (isolates the
    # fused reduction from input-quantization differences) ...
    assert jnp.allclose(loss, jnp.mean((G_k - T_k) ** 2), rtol=1e-3, atol=1e-10)
    # ... and against the fully independent f32 reference.
    assert jnp.allclose(loss, loss_ref, rtol=5e-2, atol=1e-8)

    print("KERNEL_OK")
</pallas_src>

<mosaic_0001>
module attributes {stable_mosaic.version = 11 : i64} {
  func.func @_gram_rowblock_kernel(%arg0: i32, %arg1: memref<8x256xbf16, #tpu.memory_space<vmem>>, %arg2: memref<8x8xf32, #tpu.memory_space<vmem>>, %arg3: memref<8x8xf32, #tpu.memory_space<vmem>>) attributes {dimension_semantics = [#tpu.dimension_semantics<arbitrary>], iteration_bounds = array<i64: 1>, scalar_prefetch = 0 : i64, scratch_operands = 1 : i64, tpu.core_type = #tpu.core_type<tc>, window_params = [{transform_indices = @transform_0, window_bounds = array<i64: 8, 256>}, {pipeline_mode = #tpu.pipeline_mode<synchronous>, transform_indices = @transform_1, window_bounds = array<i64: 8, 8>}]} {
    %c0_i32 = arith.constant 0 : i32
    %0 = arith.cmpi eq, %arg0, %c0_i32 : i32
    %1 = arith.extui %0 : i1 to i32
    %c0_i32_0 = arith.constant 0 : i32
    %2 = arith.cmpi ne, %1, %c0_i32_0 : i32
    scf.if %2 {
      %cst_8 = arith.constant 0.000000e+00 : f32
      %11 = vector.broadcast %cst_8 : f32 to vector<8x8xf32>
      %c0_9 = arith.constant 0 : index
      %c0_10 = arith.constant 0 : index
      %12 = vector.load %arg3[%c0_9, %c0_10] : memref<8x8xf32, #tpu.memory_space<vmem>>, vector<8x8xf32>
      tpu.vector_store %arg3[%c0_9, %c0_10], %11 {strides = array<i32>} : memref<8x8xf32, #tpu.memory_space<vmem>>, vector<8x8xf32>,
    } else {
    }
    %c0 = arith.constant 0 : index
    %c0_1 = arith.constant 0 : index
    %3 = vector.load %arg1[%c0, %c0_1] : memref<8x256xbf16, #tpu.memory_space<vmem>>, vector<8x256xbf16>
    %c0_2 = arith.constant 0 : index
    %c0_3 = arith.constant 0 : index
    %4 = vector.load %arg3[%c0_2, %c0_3] : memref<8x8xf32, #tpu.memory_space<vmem>>, vector<8x8xf32>
    %cst = arith.constant dense<0.000000e+00> : vector<8x8xf32>
    %5 = tpu.matmul %3, %3, %cst {dimension_numbers = #tpu.dot_dimension_numbers<[1], [1], [0], [0], [0, 0, 1, 0], [], []>} : vector<8x256xbf16>, vector<8x256xbf16>, vector<8x8xf32> -> vector<8x8xf32>
    %6 = arith.addf %4, %5 : vector<8x8xf32>
    %c0_4 = arith.constant 0 : index
    %c0_5 = arith.constant 0 : index
    %7 = vector.load %arg3[%c0_4, %c0_5] : memref<8x8xf32, #tpu.memory_space<vmem>>, vector<8x8xf32>
    tpu.vector_store %arg3[%c0_4, %c0_5], %6 {strides = array<i32>} : memref<8x8xf32, #tpu.memory_space<vmem>>, vector<8x8xf32>,
    %c0_i32_6 = arith.constant 0 : i32
    %8 = arith.cmpi eq, %arg0, %c0_i32_6 : i32
    %9 = arith.extui %8 : i1 to i32
    %c0_i32_7 = arith.constant 0 : i32
    %10 = arith.cmpi ne, %9, %c0_i32_7 : i32
    scf.if %10 {
      %c0_8 = arith.constant 0 : index
      %c0_9 = arith.constant 0 : index
      %11 = vector.load %arg3[%c0_8, %c0_9] : memref<8x8xf32, #tpu.memory_space<vmem>>, vector<8x8xf32>
      %cst_10 = arith.constant 4.8828125E-4 : f32
      %12 = vector.broadcast %cst_10 : f32 to vector<8x8xf32>
      %13 = arith.mulf %11, %12 : vector<8x8xf32>
      %c0_11 = arith.constant 0 : index
      %c0_12 = arith.constant 0 : index
      %14 = vector.load %arg2[%c0_11, %c0_12] : memref<8x8xf32, #tpu.memory_space<vmem>>, vector<8x8xf32>
      tpu.vector_store %arg2[%c0_11, %c0_12], %13 {strides = array<i32>} : memref<8x8xf32, #tpu.memory_space<vmem>>, vector<8x8xf32>,
    } else {
    }
    return
  }
  func.func @transform_0(%arg0: i32) -> (i32, i32) {
    %c0_i32 = arith.constant 0 : i32
    %c0_i32_0 = arith.constant 0 : i32
    return %c0_i32, %arg0 : i32, i32
  }
  func.func @transform_1(%arg0: i32) -> (i32, i32) {
    %c0_i32 = arith.constant 0 : i32
    %c0_i32_0 = arith.constant 0 : i32
    %c0_i32_1 = arith.constant 0 : i32
    return %c0_i32, %c0_i32_0 : i32, i32
  }
}

</mosaic_0001>

<llo_original>
// kernel: tpu_custom_call.1
$region0: #{tpu_custom_call.1}
  #allocation0 [shape = 'u32[]', space=smem, size = 0x4, offset = 0x4, fixed_abs, tag = 'smem constant byte address 0x4 - core index']
  #allocation1 [shape = 'u32[144,128]{1,0:T(1,128)}', space=vmem, size = 0x12000, scoped, tag = 'internal scratch']
  #allocation2 [shape = 'f32[8,8]{1,0:T(8,128)}', space=vmem, size = 0x1000, scoped, tag = 'scratch operand']
  %s0 = inlined_call_operand.hbm [shape: bf16[8,256], index: 0, kind: input, shape index: {}]
  %s1 = inlined_call_operand.hbm [shape: f32[8,8], index: 1, kind: output, shape index: {}]
  %s2 = sld [smem:[#allocation0]]
  $region26: #{tpu_custom_call.1} parent=0
    _
  %s4 = ssub.s32 1, %s2
  %s5 = scalar_select 0, %s4, %s2
  $region1: #{tpu_custom_call.1} parent=0
    #allocation3 [shape = 'u8[4096]{0}', space=vmem, size = 0x1000, scoped, tag = 'input window, operand 0, single buffered']
    #allocation4 [shape = 's32[1]{0}', space=sflag, size = 0x4, scoped, tag = 'scoped memory for tpu_custom_call.1']
    #allocation5 [shape = 's32[1]{0}', space=sflag, size = 0x4, scoped, tag = 'scoped memory for tpu_custom_call.1']
    #allocation6 [shape = 'u8[4096]{0}', space=vmem, size = 0x1000, scoped, tag = 'output window, operand 0, single buffered']
    %6 = vsyncpa [#allocation4], 0
    %7 = vsyncpa [#allocation5], 0
    // Predicated region
    $region2: #{tpu_custom_call.1} parent=1 // pred_check
      _
    $region3: #{tpu_custom_call.1} parent=1 // pred_check_branch
      %9 = sbr.rel (0) target = $region5
    $region4: #{tpu_custom_call.1} parent=1 // pred_region
      %s11 = ssub.s32 128, 128
      %12 = vsyncadd [#allocation4], %s11
      %s14 = sshll.u32 [#allocation3], 4
      %s15 = int_to_ptr.vmem [resolvable:$true] %s14
      %17 = dma.hbm_to_vmem [thread:$0]  %s0, 128, %s15, [#allocation4]
    $region5: #{tpu_custom_call.1} parent=1 // pred_fallthru
      _
    // Predicated region
    $region6: #{tpu_custom_call.1} parent=1 // pred_check
      _
    $region7: #{tpu_custom_call.1} parent=1 // pred_check_branch
      %19 = sbr.rel (0) target = $region9
    $region8: #{tpu_custom_call.1} parent=1 // pred_region
      %20 = dma.done [#allocation4], 128
    $region9: #{tpu_custom_call.1} parent=1 // pred_fallthru
      _
    %p22 = scmp.eq.s32.totalorder 0, 0
    // Predicated region
    $region10: #{tpu_custom_call.1} parent=1 // pred_check
      %p23 = pneg %p22
    $region11: #{tpu_custom_call.1} parent=1 // pred_check_branch
      %25 = sbr.rel (%p23) target = $region13
    $region12: #{tpu_custom_call.1} parent=1 // pred_region
      %vm26 = vcmask 64512
      %27 = vst.msk [vmem:[#allocation2] sm:$0xff] %vm26, 0.0
    $region13: #{tpu_custom_call.1} parent=1 // pred_fallthru
      _
    %v28 = vld [vmem:[#allocation3] sm:$0xff]
    %v29 = vld [vmem:[#allocation2] sm:$0xff]
    %v31 = vunpack.c.l.b16 %v28
    %v32 = vunpack.c.h.b16 %v28
    %v33 = vpack.c.b16 %v31, %v31
    %v34 = vpack.c.b16 %v32, %v32
    %37 = vmatprep.subr.bf16.mxu0 %v34
    %38 = vmatpush1.bf16.xpose.msra.mxu0 %v33
    %39 = vmatprep.subr.bf16.mxu0 0
    %40 = vmatpush1.bf16.xpose.msra.mxu0 0
    %41 = vmatprep.subr.bf16.mxu0 0
    %42 = vmatpush1.bf16.xpose.msra.mxu0 0
    %43 = vmatprep.subr.bf16.mxu0 0
    %44 = vmatpush1.bf16.xpose.msra.mxu0 0
    %45 = vmatprep.subr.bf16.mxu0 0
    %46 = vmatpush1.bf16.xpose.msra.mxu0 0
    %47 = vmatprep.subr.bf16.mxu0 0
    %48 = vmatpush1.bf16.xpose.msra.mxu0 0
    %49 = vmatprep.subr.bf16.mxu0 0
    %50 = vmatpush1.bf16.xpose.msra.mxu0 0
    %51 = vmatprep.subr.bf16.mxu0 0
    %52 = vmatpush1.bf16.xpose.msra.mxu0 0
    %53 = vmatprep.subr.bf16.mxu0 0
    %54 = vmatpush1.bf16.xpose.msra.mxu0 0
    %55 = vmatprep.subr.bf16.mxu0 0
    %56 = vmatpush1.bf16.xpose.msra.mxu0 0
    %57 = vmatprep.subr.bf16.mxu0 0
    %58 = vmatpush1.bf16.xpose.msra.mxu0 0
    %59 = vmatprep.subr.bf16.mxu0 0
    %60 = vmatpush1.bf16.xpose.msra.mxu0 0
    %61 = vmatprep.subr.bf16.mxu0 0
    %62 = vmatpush1.bf16.xpose.msra.mxu0 0
    %63 = vmatprep.subr.bf16.mxu0 0
    %64 = vmatpush1.bf16.xpose.msra.mxu0 0
    %65 = vmatprep.subr.bf16.mxu0 0
    %66 = vmatpush1.bf16.xpose.msra.mxu0 0
    %67 = vmatprep.subr.bf16.mxu0 0
    %68 = vmatpush1.bf16.xpose.msra.mxu0 0
    %69 = vmatprep.mubr.bf16.mxu0 %v34
    %70 = vmatmul.mubr.bf16.gmra.mrb[0].mxu0 %v33
    %v71 = vpop.f32.mrb[0].mxu0
    %v72 = vadd.f32 0.0, %v71
    %v73 = vpop.f32.mrb[0].mxu0
    %v74 = vpop.f32.mrb[0].mxu0
    %v75 = vpop.f32.mrb[0].mxu0
    %76 = vdwg.mxu0
    %v77 = vadd.f32 %v29, %v72
    %vm78 = vcmask 64512
    %79 = vst.msk [vmem:[#allocation2] sm:$0xff] %vm78, %v77
    // Predicated region
    $region14: #{tpu_custom_call.1} parent=1 // pred_check
      %p80 = pneg %p22
    $region15: #{tpu_custom_call.1} parent=1 // pred_check_branch
      %82 = sbr.rel (%p80) target = $region17
    $region16: #{tpu_custom_call.1} parent=1 // pred_region
      %v83 = vld [vmem:[#allocation2] sm:$0xff]
      %v84 = vmul.f32 %v83, 0.00048828125
      %85 = vst.msk [vmem:[#allocation6] sm:$0xff] %vm78, %v84
    $region17: #{tpu_custom_call.1} parent=1 // pred_fallthru
      _
    // Predicated region
    $region18: #{tpu_custom_call.1} parent=1 // pred_check
      _
    $region19: #{tpu_custom_call.1} parent=1 // pred_check_branch
      %87 = sbr.rel (0) target = $region21
    $region20: #{tpu_custom_call.1} parent=1 // pred_region
      %s89 = ssub.s32 128, 128
      %90 = vsyncadd [#allocation5], %s89
      %s92 = sshll.u32 [#allocation6], 4
      %s93 = int_to_ptr.vmem [resolvable:$true] %s92
      %95 = dma.vmem_to_hbm [thread:$0]  %s93, 128, %s1, [#allocation5]
    $region21: #{tpu_custom_call.1} parent=1 // pred_fallthru
      _
    // Predicated region
    $region22: #{tpu_custom_call.1} parent=1 // pred_check
      _
    $region23: #{tpu_custom_call.1} parent=1 // pred_check_branch
      %97 = sbr.rel (0) target = $region25
    $region24: #{tpu_custom_call.1} parent=1 // pred_region
      %98 = dma.done [#allocation5], 128
    $region25: #{tpu_custom_call.1} parent=1 // pred_fallthru
      _
    %99 = vsyncpa [#allocation4], 1
    %100 = vsyncpa [#allocation5], 1

</llo_original>
